<compile_context>
chip_gen: v7x
topology: tpu7x:2x2x1
jax: 0.10.0
libtpu: 0.0.40
codegen_flags: <defaults>
</compile_context>

<pallas_src>
import functools

import jax
import jax.numpy as jnp
from jax import lax
from jax.experimental import pallas as pl
from jax.experimental.pallas import tpu as pltpu


def _round_up(x, m):
    return (x + m - 1) // m * m


def exloss_kernel(x_ref, vt_ref, tgt_ref, logits_ref, loss_ref, *, t):
    """Grid axis 0 walks feature (K) tiles.  The (B, C) logits output block is
    the resident f32 accumulator; the cross-entropy epilogue runs on the last
    K step."""
    k = pl.program_id(0)

    @pl.when(k == 0)
    def _():
        logits_ref[...] = jnp.zeros_like(logits_ref)

    # inputs.mm(V.t()) with V streamed transposed as Vt = V.T (D, C):
    # contract lane axis of the x tile with the sublane axis of the Vt tile.
    logits_ref[...] += lax.dot_general(
        x_ref[...], vt_ref[...],
        dimension_numbers=(((1,), (0,)), ((), ())),
        preferred_element_type=jnp.float32,
    )

    @pl.when(k == pl.num_programs(0) - 1)
    def _():
        logits = logits_ref[...] * t                    # (B, C) f32
        logits_ref[...] = logits

        # Cross entropy, mean reduction.
        # TODO(synk): class-weight (self.weight) and ignore_index=-100 paths
        #             are not implemented (module defaults: weight=None).
        m = jnp.max(logits, axis=-1, keepdims=True)
        lse = m + jnp.log(jnp.sum(jnp.exp(logits - m), axis=-1, keepdims=True))
        cls_ids = lax.broadcasted_iota(jnp.int32, logits.shape, 1)   # (B, C)
        onehot = (cls_ids == tgt_ref[...]).astype(jnp.float32)       # tgt (B, 1)
        tgt_logit = jnp.sum(logits * onehot, axis=-1, keepdims=True)
        per_ex = lse - tgt_logit                                     # (B, 1)
        loss_ref[...] = (jnp.sum(per_ex) / per_ex.shape[0]).reshape(1, 1)


def ex_loss(inputs, V, targets, *, t=1.0, tk=None, operand_dtype=None,
            v_is_transposed=False):
    """Pallas implementation of ExLoss.forward. Returns (loss, outputs).

    inputs : (B, D), V : (C, D) (or (D, C) if v_is_transposed), targets : (B,)
    operand_dtype : optional streaming dtype (e.g. jnp.bfloat16); accumulation
                    stays f32.
    """
    B, D = inputs.shape
    if v_is_transposed:
        D2, C = V.shape
        Vt = V
    else:
        C, D2 = V.shape
        Vt = V.T   # one-time layout change; keep V stored (D, C) upstream to avoid it
    assert D == D2

    if operand_dtype is not None:
        inputs = inputs.astype(operand_dtype)
        Vt = Vt.astype(operand_dtype)
    op_itemsize = jnp.dtype(inputs.dtype).itemsize

    # K-tile selection: biggest tile that keeps double-buffered (tk, C) V tiles
    # within a modest VMEM budget (the kernel is mem-bound; bigger tiles win).
    v_tile_budget = 24 * 2**20
    tk_cap = max(128, (v_tile_budget // (2 * C * op_itemsize)) // 128 * 128)
    if tk is None:
        tk = min(_round_up(D, 128), 1024, tk_cap)
    D_pad = _round_up(D, tk)
    if D_pad != D:   # zero-pad K: padded columns/rows add exactly 0 to the dot
        inputs = jnp.pad(inputs, ((0, 0), (0, D_pad - D)))
        Vt = jnp.pad(Vt, ((0, D_pad - D), (0, 0)))

    tgt = targets.astype(jnp.int32).reshape(B, 1)

    # Scoped-VMEM sizing: double-buffered input/V tiles + resident logits + slack.
    need = (2 * B * tk * op_itemsize + 2 * tk * C * op_itemsize
            + B * C * 4 + B * 4 + (1 << 20))
    vmem_limit = int(min(64 * 2**20, max(2 * need, 16 * 2**20)))

    cost = pl.CostEstimate(
        flops=2 * B * C * D,
        transcendentals=B * C,   # exp in the softmax epilogue
        bytes_accessed=(B * D + D * C) * op_itemsize + B * C * 4 + B * 4 + 4,
    )

    kernel = functools.partial(exloss_kernel, t=float(t))
    logits, loss = pl.pallas_call(
        kernel,
        out_shape=(
            jax.ShapeDtypeStruct((B, C), jnp.float32),   # outputs (logits)
            jax.ShapeDtypeStruct((1, 1), jnp.float32),   # scalar loss
        ),
        grid_spec=pltpu.PrefetchScalarGridSpec(
            num_scalar_prefetch=0,
            grid=(D_pad // tk,),
            in_specs=[
                pl.BlockSpec((B, tk), lambda k: (0, k)),   # inputs K tile
                pl.BlockSpec((tk, C), lambda k: (k, 0)),   # Vt K tile (contiguous rows)
                pl.BlockSpec((B, 1), lambda k: (0, 0)),    # targets (resident)
            ],
            out_specs=(
                pl.BlockSpec((B, C), lambda k: (0, 0)),    # resident accumulator
                pl.BlockSpec((1, 1), lambda k: (0, 0)),
            ),
        ),
        compiler_params=pltpu.CompilerParams(
            dimension_semantics=("arbitrary",),
            vmem_limit_bytes=vmem_limit,
        ),
        cost_estimate=cost,
    )(inputs, Vt, tgt)
    return loss[0, 0], logits


if __name__ == "__main__":
    # Small shapes consistent with the module: batch=8, features=256, classes=128.
    B, D, C = 8, 256, 128
    t = 1.0

    key = jax.random.PRNGKey(0)
    k1, k2, k3, k4 = jax.random.split(key, 4)
    inputs = jax.random.normal(k1, (B, D), jnp.float32)
    targets = jax.random.randint(k3, (B,), 0, C, dtype=jnp.int32)

    # The module registers V as a zero buffer; initialize it deterministically
    # with L2-normalized rows (as the backward update would produce) so the
    # cross-entropy path is non-trivial.
    V = jax.random.normal(k2, (C, D), jnp.float32)
    V = V / jnp.linalg.norm(V, axis=1, keepdims=True)

    def reference(inp, Vm, tg, tt):
        lg = (inp @ Vm.T) * tt
        lse = jax.scipy.special.logsumexp(lg, axis=-1)
        return jnp.mean(lse - lg[jnp.arange(inp.shape[0]), tg]), lg

    ref_loss, ref_logits = reference(inputs, V, targets, t)

    # 1) f32 operands, single K step (tk defaults to D).
    loss, outputs = ex_loss(inputs, V, targets, t=t)
    jax.block_until_ready((loss, outputs))
    assert outputs.shape == (B, C) and loss.shape == ()
    assert jnp.allclose(outputs, ref_logits, atol=1e-4, rtol=1e-4)
    assert jnp.allclose(loss, ref_loss, atol=1e-5, rtol=1e-5)

    # 2) bf16 streamed operands (f32 accumulation), multi-step K grid.
    loss_bf, out_bf = ex_loss(inputs, V, targets, t=t, tk=128,
                              operand_dtype=jnp.bfloat16)
    jax.block_until_ready((loss_bf, out_bf))
    assert jnp.allclose(out_bf, ref_logits, atol=5e-2, rtol=5e-2)
    assert jnp.allclose(loss_bf, ref_loss, atol=5e-2, rtol=5e-2)

    # 3) Non-multiple-of-128 feature dim exercises the zero-padding path.
    D3 = 200
    inputs3 = jax.random.normal(k4, (B, D3), jnp.float32)
    V3 = jax.random.normal(k2, (C, D3), jnp.float32)
    V3 = V3 / jnp.linalg.norm(V3, axis=1, keepdims=True)
    ref_loss3, ref_logits3 = reference(inputs3, V3, targets, t)
    loss3, out3 = ex_loss(inputs3, V3, targets, t=t)
    jax.block_until_ready((loss3, out3))
    assert jnp.allclose(out3, ref_logits3, atol=1e-4, rtol=1e-4)
    assert jnp.allclose(loss3, ref_loss3, atol=1e-5, rtol=1e-5)

    print("KERNEL_OK")
</pallas_src>

<mosaic_0001>
module attributes {stable_mosaic.version = 11 : i64} {
  func.func @exloss_kernel(%arg0: i32, %arg1: memref<8x256xf32, #tpu.memory_space<vmem>>, %arg2: memref<256x128xf32, #tpu.memory_space<vmem>>, %arg3: memref<8x1xi32, #tpu.memory_space<vmem>>, %arg4: memref<8x128xf32, #tpu.memory_space<vmem>>, %arg5: memref<1x1xf32, #tpu.memory_space<vmem>>) attributes {dimension_semantics = [#tpu.dimension_semantics<arbitrary>], iteration_bounds = array<i64: 1>, scalar_prefetch = 0 : i64, scratch_operands = 0 : i64, tpu.core_type = #tpu.core_type<tc>, window_params = [{transform_indices = @transform_0, window_bounds = array<i64: 8, 256>}, {transform_indices = @transform_1, window_bounds = array<i64: 256, 128>}, {pipeline_mode = #tpu.pipeline_mode<synchronous>, transform_indices = @transform_2, window_bounds = array<i64: 8, 1>}, {pipeline_mode = #tpu.pipeline_mode<synchronous>, transform_indices = @transform_3, window_bounds = array<i64: 8, 128>}, {pipeline_mode = #tpu.pipeline_mode<synchronous>, transform_indices = @transform_4, window_bounds = array<i64: 1, 1>}]} {
    %c0_i32 = arith.constant 0 : i32
    %0 = arith.cmpi eq, %arg0, %c0_i32 : i32
    %1 = arith.extui %0 : i1 to i32
    %c0_i32_0 = arith.constant 0 : i32
    %2 = arith.cmpi ne, %1, %c0_i32_0 : i32
    scf.if %2 {
      %cst_10 = arith.constant 0.000000e+00 : f32
      %12 = vector.broadcast %cst_10 : f32 to vector<8x128xf32>
      %c0_11 = arith.constant 0 : index
      %c0_12 = arith.constant 0 : index
      %13 = vector.load %arg4[%c0_11, %c0_12] : memref<8x128xf32, #tpu.memory_space<vmem>>, vector<8x128xf32>
      tpu.vector_store %arg4[%c0_11, %c0_12], %12 {strides = array<i32>} : memref<8x128xf32, #tpu.memory_space<vmem>>, vector<8x128xf32>,
    } else {
    }
    %c0 = arith.constant 0 : index
    %c0_1 = arith.constant 0 : index
    %3 = vector.load %arg4[%c0, %c0_1] : memref<8x128xf32, #tpu.memory_space<vmem>>, vector<8x128xf32>
    %c0_2 = arith.constant 0 : index
    %c0_3 = arith.constant 0 : index
    %4 = vector.load %arg1[%c0_2, %c0_3] : memref<8x256xf32, #tpu.memory_space<vmem>>, vector<8x256xf32>
    %c0_4 = arith.constant 0 : index
    %c0_5 = arith.constant 0 : index
    %5 = vector.load %arg2[%c0_4, %c0_5] : memref<256x128xf32, #tpu.memory_space<vmem>>, vector<256x128xf32>
    %cst = arith.constant dense<0.000000e+00> : vector<8x128xf32>
    %6 = tpu.matmul %4, %5, %cst {dimension_numbers = #tpu.dot_dimension_numbers<[1], [0], [0], [1], [0, 0, 1, 1], [], []>} : vector<8x256xf32>, vector<256x128xf32>, vector<8x128xf32> -> vector<8x128xf32>
    %7 = arith.addf %3, %6 : vector<8x128xf32>
    %c0_6 = arith.constant 0 : index
    %c0_7 = arith.constant 0 : index
    %8 = vector.load %arg4[%c0_6, %c0_7] : memref<8x128xf32, #tpu.memory_space<vmem>>, vector<8x128xf32>
    tpu.vector_store %arg4[%c0_6, %c0_7], %7 {strides = array<i32>} : memref<8x128xf32, #tpu.memory_space<vmem>>, vector<8x128xf32>,
    %c0_i32_8 = arith.constant 0 : i32
    %9 = arith.cmpi eq, %arg0, %c0_i32_8 : i32
    %10 = arith.extui %9 : i1 to i32
    %c0_i32_9 = arith.constant 0 : i32
    %11 = arith.cmpi ne, %10, %c0_i32_9 : i32
    scf.if %11 {
      %c0_10 = arith.constant 0 : index
      %c0_11 = arith.constant 0 : index
      %12 = vector.load %arg4[%c0_10, %c0_11] : memref<8x128xf32, #tpu.memory_space<vmem>>, vector<8x128xf32>
      %cst_12 = arith.constant 1.000000e+00 : f32
      %13 = vector.broadcast %cst_12 : f32 to vector<8x128xf32>
      %14 = arith.mulf %12, %13 : vector<8x128xf32>
      %c0_13 = arith.constant 0 : index
      %c0_14 = arith.constant 0 : index
      %15 = vector.load %arg4[%c0_13, %c0_14] : memref<8x128xf32, #tpu.memory_space<vmem>>, vector<8x128xf32>
      tpu.vector_store %arg4[%c0_13, %c0_14], %14 {strides = array<i32>} : memref<8x128xf32, #tpu.memory_space<vmem>>, vector<8x128xf32>,
      %cst_15 = arith.constant dense<0xFF800000> : vector<8xf32>
      %16 = vector.multi_reduction <maximumf>, %14, %cst_15 [1] : vector<8x128xf32> to vector<8xf32>
      %17 = vector.shape_cast %16 : vector<8xf32> to vector<8x1xf32>
      %18 = vector.broadcast %17 : vector<8x1xf32> to vector<8x128xf32>
      %19 = arith.subf %14, %18 : vector<8x128xf32>
      %20 = math.exp %19 : vector<8x128xf32>
      %cst_16 = arith.constant dense<0.000000e+00> : vector<8xf32>
      %21 = vector.multi_reduction <add>, %20, %cst_16 [1] : vector<8x128xf32> to vector<8xf32>
      %22 = vector.shape_cast %21 : vector<8xf32> to vector<8x1xf32>
      %23 = math.log %22 : vector<8x1xf32>
      %24 = arith.addf %17, %23 : vector<8x1xf32>
      %25 = tpu.iota {dimensions = array<i32: 1>} : vector<8x128xi32>
      %c0_17 = arith.constant 0 : index
      %c0_18 = arith.constant 0 : index
      %26 = vector.load %arg3[%c0_17, %c0_18] : memref<8x1xi32, #tpu.memory_space<vmem>>, vector<8x1xi32>
      %27 = vector.broadcast %26 : vector<8x1xi32> to vector<8x128xi32>
      %28 = arith.cmpi eq, %25, %27 : vector<8x128xi32>
      %29 = arith.extui %28 : vector<8x128xi1> to vector<8x128xi32>
      %30 = arith.sitofp %29 : vector<8x128xi32> to vector<8x128xf32>
      %31 = arith.mulf %14, %30 : vector<8x128xf32>
      %cst_19 = arith.constant dense<0.000000e+00> : vector<8xf32>
      %32 = vector.multi_reduction <add>, %31, %cst_19 [1] : vector<8x128xf32> to vector<8xf32>
      %33 = vector.shape_cast %32 : vector<8xf32> to vector<8x1xf32>
      %34 = arith.subf %24, %33 : vector<8x1xf32>
      %35 = vector.shape_cast %34 : vector<8x1xf32> to vector<1x8x1xf32>
      %cst_20 = arith.constant dense<0.000000e+00> : vector<1xf32>
      %36 = vector.multi_reduction <add>, %35, %cst_20 [1, 2] : vector<1x8x1xf32> to vector<1xf32>
      %37 = vector.shape_cast %36 : vector<1xf32> to vector<1x1x1xf32>
      %38 = vector.extract %37[0, 0, 0] : f32 from vector<1x1x1xf32>
      %cst_21 = arith.constant 8.000000e+00 : f32
      %39 = arith.divf %38, %cst_21 : f32
      %40 = vector.broadcast %39 : f32 to vector<1x1xf32>
      %c0_22 = arith.constant 0 : index
      %c0_23 = arith.constant 0 : index
      %41 = vector.load %arg5[%c0_22, %c0_23] : memref<1x1xf32, #tpu.memory_space<vmem>>, vector<1x1xf32>
      tpu.vector_store %arg5[%c0_22, %c0_23], %40 {strides = array<i32>} : memref<1x1xf32, #tpu.memory_space<vmem>>, vector<1x1xf32>,
    } else {
    }
    return
  }
  func.func @transform_0(%arg0: i32) -> (i32, i32) {
    %c0_i32 = arith.constant 0 : i32
    %c0_i32_0 = arith.constant 0 : i32
    return %c0_i32, %arg0 : i32, i32
  }
  func.func @transform_1(%arg0: i32) -> (i32, i32) {
    %c0_i32 = arith.constant 0 : i32
    %c0_i32_0 = arith.constant 0 : i32
    return %arg0, %c0_i32 : i32, i32
  }
  func.func @transform_2(%arg0: i32) -> (i32, i32) {
    %c0_i32 = arith.constant 0 : i32
    %c0_i32_0 = arith.constant 0 : i32
    %c0_i32_1 = arith.constant 0 : i32
    return %c0_i32, %c0_i32_0 : i32, i32
  }
  func.func @transform_3(%arg0: i32) -> (i32, i32) {
    %c0_i32 = arith.constant 0 : i32
    %c0_i32_0 = arith.constant 0 : i32
    %c0_i32_1 = arith.constant 0 : i32
    return %c0_i32, %c0_i32_0 : i32, i32
  }
  func.func @transform_4(%arg0: i32) -> (i32, i32) {
    %c0_i32 = arith.constant 0 : i32
    %c0_i32_0 = arith.constant 0 : i32
    %c0_i32_1 = arith.constant 0 : i32
    return %c0_i32, %c0_i32_0 : i32, i32
  }
}

</mosaic_0001>

<llo_original>
// kernel: tpu_custom_call.1
$region0: #{tpu_custom_call.1}
  #allocation0 [shape = 'u32[]', space=smem, size = 0x4, offset = 0x4, fixed_abs, tag = 'smem constant byte address 0x4 - core index']
  #allocation1 [shape = 'u32[144,128]{1,0:T(1,128)}', space=vmem, size = 0x12000, scoped, tag = 'internal scratch']
  %s0 = inlined_call_operand.hbm [shape: f32[8,256], index: 0, kind: input, shape index: {}]
  %s1 = inlined_call_operand.hbm [shape: f32[256,128], index: 1, kind: input, shape index: {}]
  %s2 = inlined_call_operand.vmem [shape: s32[8,1], index: 2, kind: input, shape index: {}]
  %s3 = inlined_call_operand.hbm [shape: f32[8,128], index: 3, kind: output, shape index: {0}]
  %s4 = inlined_call_operand.hbm [shape: f32[1,1], index: 4, kind: output, shape index: {1}]
  %5 = xla_tuple %s3, %s4
  %s6 = sld [smem:[#allocation0]]
  $region46: #{tpu_custom_call.1} parent=0
    _
  %s8 = ssub.s32 1, %s6
  %s9 = scalar_select 0, %s8, %s6
  $region1: #{tpu_custom_call.1} parent=0
    #allocation2 [shape = 'u8[8192]{0}', space=vmem, size = 0x2000, scoped, tag = 'input window, operand 0, single buffered']
    #allocation3 [shape = 's32[1]{0}', space=sflag, size = 0x4, scoped, tag = 'scoped memory for tpu_custom_call.1']
    #allocation4 [shape = 's32[1]{0}', space=sflag, size = 0x4, scoped, tag = 'scoped memory for tpu_custom_call.1']
    #allocation5 [shape = 'u8[131072]{0}', space=vmem, size = 0x20000, scoped, tag = 'input window, operand 1, single buffered']
    #allocation6 [shape = 's32[1]{0}', space=sflag, size = 0x4, scoped, tag = 'scoped memory for tpu_custom_call.1']
    #allocation7 [shape = 'u8[4096]{0}', space=vmem, size = 0x1000, scoped, tag = 'output window, operand 0, single buffered']
    #allocation8 [shape = 'u8[512]{0}', space=vmem, size = 0x400, scoped, tag = 'output window, operand 1, single buffered']
    #allocation9 [shape = 's32[1]{0}', space=sflag, size = 0x4, scoped, tag = 'scoped memory for tpu_custom_call.1']
    %10 = vsyncpa [#allocation3], 0
    %11 = vsyncpa [#allocation6], 0
    %12 = vsyncpa [#allocation4], 0
    %13 = vsyncpa [#allocation9], 0
    // Predicated region
    $region2: #{tpu_custom_call.1} parent=1 // pred_check
      _
    $region3: #{tpu_custom_call.1} parent=1 // pred_check_branch
      %15 = sbr.rel (0) target = $region5
    $region4: #{tpu_custom_call.1} parent=1 // pred_region
      %s17 = ssub.s32 256, 256
      %18 = vsyncadd [#allocation3], %s17
      %s20 = sshll.u32 [#allocation2], 4
      %s21 = int_to_ptr.vmem [resolvable:$true] %s20
      %23 = dma.hbm_to_vmem [thread:$0]  %s0, 256, %s21, [#allocation3]
    $region5: #{tpu_custom_call.1} parent=1 // pred_fallthru
      _
    // Predicated region
    $region6: #{tpu_custom_call.1} parent=1 // pred_check
      _
    $region7: #{tpu_custom_call.1} parent=1 // pred_check_branch
      %25 = sbr.rel (0) target = $region9
    $region8: #{tpu_custom_call.1} parent=1 // pred_region
      %s27 = ssub.s32 4096, 4096
      %28 = vsyncadd [#allocation6], %s27
      %s29 = sshll.u32 [#allocation5], 4
      %s30 = int_to_ptr.vmem [resolvable:$true] %s29
      %35 = dma.hbm_to_vmem [thread:$0]  %s1, 4096, %s30, [#allocation6], 128, 128, 8
    $region9: #{tpu_custom_call.1} parent=1 // pred_fallthru
      _
    // Predicated region
    $region10: #{tpu_custom_call.1} parent=1 // pred_check
      _
    $region11: #{tpu_custom_call.1} parent=1 // pred_check_branch
      %37 = sbr.rel (0) target = $region13
    $region12: #{tpu_custom_call.1} parent=1 // pred_region
      _
    $region13: #{tpu_custom_call.1} parent=1 // pred_fallthru
      _
    // Predicated region
    $region14: #{tpu_custom_call.1} parent=1 // pred_check
      _
    $region15: #{tpu_custom_call.1} parent=1 // pred_check_branch
      %39 = sbr.rel (0) target = $region17
    $region16: #{tpu_custom_call.1} parent=1 // pred_region
      %40 = dma.done [#allocation3], 256
    $region17: #{tpu_custom_call.1} parent=1 // pred_fallthru
      _
    // Predicated region
    $region18: #{tpu_custom_call.1} parent=1 // pred_check
      _
    $region19: #{tpu_custom_call.1} parent=1 // pred_check_branch
      %42 = sbr.rel (0) target = $region21
    $region20: #{tpu_custom_call.1} parent=1 // pred_region
      %43 = dma.done [#allocation6], 4096
    $region21: #{tpu_custom_call.1} parent=1 // pred_fallthru
      _
    %p44 = scmp.eq.s32.totalorder 0, 0
    // Predicated region
    $region22: #{tpu_custom_call.1} parent=1 // pred_check
      %p45 = pneg %p44
    $region23: #{tpu_custom_call.1} parent=1 // pred_check_branch
      %47 = sbr.rel (%p45) target = $region25
    $region24: #{tpu_custom_call.1} parent=1 // pred_region
      %48 = vst [vmem:[#allocation7] sm:$0xff] 0.0
    $region25: #{tpu_custom_call.1} parent=1 // pred_fallthru
      _
    %v49 = vld [vmem:[#allocation7] sm:$0xff]
    %v50 = vld [vmem:[#allocation2] sm:$0xff]
    %v51 = vld [vmem:[#allocation2 + $0x8] sm:$0xff]
    %v52 = vld [vmem:[#allocation5] sm:$0xff]
    %v53 = vld [vmem:[#allocation5 + $0x8] sm:$0xff]
    %v54 = vld [vmem:[#allocation5 + $0x10] sm:$0xff]
    %v55 = vld [vmem:[#allocation5 + $0x18] sm:$0xff]
    %v56 = vld [vmem:[#allocation5 + $0x20] sm:$0xff]
    %v57 = vld [vmem:[#allocation5 + $0x28] sm:$0xff]
    %v58 = vld [vmem:[#allocation5 + $0x30] sm:$0xff]
    %v59 = vld [vmem:[#allocation5 + $0x38] sm:$0xff]
    %v60 = vld [vmem:[#allocation5 + $0x40] sm:$0xff]
    %v61 = vld [vmem:[#allocation5 + $0x48] sm:$0xff]
    %v62 = vld [vmem:[#allocation5 + $0x50] sm:$0xff]
    %v63 = vld [vmem:[#allocation5 + $0x58] sm:$0xff]
    %v64 = vld [vmem:[#allocation5 + $0x60] sm:$0xff]
    %v65 = vld [vmem:[#allocation5 + $0x68] sm:$0xff]
    %v66 = vld [vmem:[#allocation5 + $0x70] sm:$0xff]
    %v67 = vld [vmem:[#allocation5 + $0x78] sm:$0xff]
    %v68 = vld [vmem:[#allocation5 + $0x80] sm:$0xff]
    %v69 = vld [vmem:[#allocation5 + $0x88] sm:$0xff]
    %v70 = vld [vmem:[#allocation5 + $0x90] sm:$0xff]
    %v71 = vld [vmem:[#allocation5 + $0x98] sm:$0xff]
    %v72 = vld [vmem:[#allocation5 + $0xa0] sm:$0xff]
    %v73 = vld [vmem:[#allocation5 + $0xa8] sm:$0xff]
    %v74 = vld [vmem:[#allocation5 + $0xb0] sm:$0xff]
    %v75 = vld [vmem:[#allocation5 + $0xb8] sm:$0xff]
    %v76 = vld [vmem:[#allocation5 + $0xc0] sm:$0xff]
    %v77 = vld [vmem:[#allocation5 + $0xc8] sm:$0xff]
    %v78 = vld [vmem:[#allocation5 + $0xd0] sm:$0xff]
    %v79 = vld [vmem:[#allocation5 + $0xd8] sm:$0xff]
    %v80 = vld [vmem:[#allocation5 + $0xe0] sm:$0xff]
    %v81 = vld [vmem:[#allocation5 + $0xe8] sm:$0xff]
    %v82 = vld [vmem:[#allocation5 + $0xf0] sm:$0xff]
    %v83 = vld [vmem:[#allocation5 + $0xf8] sm:$0xff]
    %84 = vmatprep.subr.mxu0 0.0
    %85 = vmatpush1.msra.mxu0 %v52
    %86 = vmatprep.subr.mxu0 0.0
    %87 = vmatpush1.msra.mxu0 %v53
    %88 = vmatprep.subr.mxu0 0.0
    %89 = vmatpush1.msra.mxu0 %v54
    %90 = vmatprep.subr.mxu0 0.0
    %91 = vmatpush1.msra.mxu0 %v55
    %92 = vmatprep.subr.mxu0 0.0
    %93 = vmatpush1.msra.mxu0 %v56
    %94 = vmatprep.subr.mxu0 0.0
    %95 = vmatpush1.msra.mxu0 %v57
    %96 = vmatprep.subr.mxu0 0.0
    %97 = vmatpush1.msra.mxu0 %v58
    %98 = vmatprep.subr.mxu0 0.0
    %99 = vmatpush1.msra.mxu0 %v59
    %100 = vmatprep.subr.mxu0 0.0
    %101 = vmatpush1.msra.mxu0 %v60
    %102 = vmatprep.subr.mxu0 0.0
    %103 = vmatpush1.msra.mxu0 %v61
    %104 = vmatprep.subr.mxu0 0.0
    %105 = vmatpush1.msra.mxu0 %v62
    %106 = vmatprep.subr.mxu0 0.0
    %107 = vmatpush1.msra.mxu0 %v63
    %108 = vmatprep.subr.mxu0 0.0
    %109 = vmatpush1.msra.mxu0 %v64
    %110 = vmatprep.subr.mxu0 0.0
    %111 = vmatpush1.msra.mxu0 %v65
    %112 = vmatprep.subr.mxu0 0.0
    %113 = vmatpush1.msra.mxu0 %v66
    %114 = vmatprep.subr.mxu0 0.0
    %115 = vmatpush1.msra.mxu0 %v67
    %116 = vmatprep.subr.mxu0 0.0
    %117 = vmatpush1.msra.mxu0 %v68
    %118 = vmatprep.subr.mxu0 0.0
    %119 = vmatpush1.msra.mxu0 %v69
    %120 = vmatprep.subr.mxu0 0.0
    %121 = vmatpush1.msra.mxu0 %v70
    %122 = vmatprep.subr.mxu0 0.0
    %123 = vmatpush1.msra.mxu0 %v71
    %124 = vmatprep.subr.mxu0 0.0
    %125 = vmatpush1.msra.mxu0 %v72
    %126 = vmatprep.subr.mxu0 0.0
    %127 = vmatpush1.msra.mxu0 %v73
    %128 = vmatprep.subr.mxu0 0.0
    %129 = vmatpush1.msra.mxu0 %v74
    %130 = vmatprep.subr.mxu0 0.0
    %131 = vmatpush1.msra.mxu0 %v75
    %132 = vmatprep.subr.mxu0 0.0
    %133 = vmatpush1.msra.mxu0 %v76
    %134 = vmatprep.subr.mxu0 0.0
    %135 = vmatpush1.msra.mxu0 %v77
    %136 = vmatprep.subr.mxu0 0.0
    %137 = vmatpush1.msra.mxu0 %v78
    %138 = vmatprep.subr.mxu0 0.0
    %139 = vmatpush1.msra.mxu0 %v79
    %140 = vmatprep.subr.mxu0 0.0
    %141 = vmatpush1.msra.mxu0 %v80
    %142 = vmatprep.subr.mxu0 0.0
    %143 = vmatpush1.msra.mxu0 %v81
    %144 = vmatprep.subr.mxu0 0.0
    %145 = vmatpush1.msra.mxu0 %v82
    %146 = vmatprep.subr.mxu0 0.0
    %147 = vmatpush1.msra.mxu0 %v83
    %148 = vmatprep.mubr.f32.mxu0 %v51
    %149 = vmatmul.mubr.f32.gmra.mrb[0].mxu0 %v50
    %v150 = vpop.f32.mrb[0].mxu0
    %v151 = vadd.f32 0.0, %v150
    %v152 = vpop.f32.mrb[0].mxu0
    %153 = vdwg.mxu0
    %v154 = vadd.f32 %v49, %v151
    %155 = vst [vmem:[#allocation7] sm:$0xff] %v154
    // Predicated region
    $region26: #{tpu_custom_call.1} parent=1 // pred_check
      %p156 = pneg %p44
    $region27: #{tpu_custom_call.1} parent=1 // pred_check_branch
      %158 = sbr.rel (%p156) target = $region29
    $region28: #{tpu_custom_call.1} parent=1 // pred_region
      %v159 = vld [vmem:[#allocation7] sm:$0xff]
      %160 = vst [vmem:[#allocation7] sm:$0xff] %v159
      %161 = vmax.xlane.f32.xlu0 %v159
      %v162 = vpop.xlane.xlu0 %161
      %v163 = vsub.f32 %v159, %v162
      %v164 = vmul.f32 %v163, 1.442695
      %v165 = vpow.pop %v164
      %166 = vadd.xlane.f32.xlu0 %v165
      %v167 = vpop.xlane.xlu0 %166
      %v168 = vlog2.pop %v167
      %v169 = vmul.f32 %v168, 0.6931472
      %v170 = vadd.f32 %v162, %v169
      %v171 = vlaneseq
      %v172 = vand.u32 %v171, 127
      %v173 = vld [vmem:[%s2] sm:$0xff]
      %174 = vset.pattern.permute.xlu0 0
      %175 = vperm.xlu0 %174, %v173
      %v176 = vpop.permute.xlu0 %175
      %vm177 = vcmp.eq.s32.totalorder %v172, %v176
      %v178 = vsel %vm177, 1, 0
      %v179 = vcvt.s32.f32 %v178
      %v180 = vmul.f32 %v159, %v179
      %181 = vadd.xlane.f32.xlu0 %v180
      %v182 = vpop.xlane.xlu0 %181
      %v183 = vsub.f32 %v170, %v182
      %vm184 = vcmask 7168
      %v185 = vsel %vm184, %v183, 0.0
      %186 = vadd.xlane.f32.xlu0 %v185
      %v187 = vpop.xlane.xlu0 %186
      %v188 = vrot.slane %v187, 4
      %v189 = vadd.f32 %v187, %v188
      %v190 = vrot.slane %v189, 2
      %v191 = vadd.f32 %v189, %v190
      %v192 = vrot.slane %v191, 1
      %v193 = vadd.f32 %v191, %v192
      %s194 = vtos %v193
      %v195 = vrcp.pop 8.0
      %s196 = vtos %v195
      %s197 = smul.f32 %s194, %s196
      %v198 = vstv %s197
      %vm199 = vcmask 0
      %200 = vst.msk [vmem:[#allocation8] sm:$0x1] %vm199, %v198
    $region29: #{tpu_custom_call.1} parent=1 // pred_fallthru
      _
    // Predicated region
    $region30: #{tpu_custom_call.1} parent=1 // pred_check
      _
    $region31: #{tpu_custom_call.1} parent=1 // pred_check_branch
      %202 = sbr.rel (0) target = $region33
    $region32: #{tpu_custom_call.1} parent=1 // pred_region
      %s204 = ssub.s32 128, 128
      %205 = vsyncadd [#allocation4], %s204
      %s207 = sshll.u32 [#allocation7], 4
      %s208 = int_to_ptr.vmem [resolvable:$true] %s207
      %210 = dma.vmem_to_hbm [thread:$0]  %s208, 128, %s3, [#allocation4]
    $region33: #{tpu_custom_call.1} parent=1 // pred_fallthru
      _
    // Predicated region
    $region34: #{tpu_custom_call.1} parent=1 // pred_check
      _
    $region35: #{tpu_custom_call.1} parent=1 // pred_check_branch
      %212 = sbr.rel (0) target = $region37
    $region36: #{tpu_custom_call.1} parent=1 // pred_region
      %s214 = ssub.s32 16, 16
      %215 = vsyncadd [#allocation9], %s214
      %s217 = sshll.u32 [#allocation8], 4
      %s218 = int_to_ptr.vmem [resolvable:$true] %s217
      %220 = dma.vmem_to_hbm [thread:$0]  %s218, 16, %s4, [#allocation9]
    $region37: #{tpu_custom_call.1} parent=1 // pred_fallthru
      _
    // Predicated region
    $region38: #{tpu_custom_call.1} parent=1 // pred_check
      _
    $region39: #{tpu_custom_call.1} parent=1 // pred_check_branch
      %222 = sbr.rel (0) target = $region41
    $region40: #{tpu_custom_call.1} parent=1 // pred_region
      %223 = dma.done [#allocation4], 128
    $region41: #{tpu_custom_call.1} parent=1 // pred_fallthru
      _
    // Predicated region
    $region42: #{tpu_custom_call.1} parent=1 // pred_check
      _
    $region43: #{tpu_custom_call.1} parent=1 // pred_check_branch
      %225 = sbr.rel (0) target = $region45
    $region44: #{tpu_custom_call.1} parent=1 // pred_region
      %226 = dma.done [#allocation9], 16
    $region45: #{tpu_custom_call.1} parent=1 // pred_fallthru
      _
    %227 = vsyncpa [#allocation3], 1
    %228 = vsyncpa [#allocation6], 1
    %229 = vsyncpa [#allocation4], 1
    %230 = vsyncpa [#allocation9], 1

</llo_original>
